<compile_context>
chip_gen: v5e
topology: v5e:2x2
jax: 0.10.0
libtpu: 0.0.40
codegen_flags: <defaults>
</compile_context>

<pallas_src>
import functools

import jax
import jax.numpy as jnp
from jax.experimental import pallas as pl
from jax.experimental.pallas import tpu as pltpu


NUM_MODELS = 5
LANE = 128      # vreg lane width
SUBLANE = 8     # vreg sublane depth


def ensemble_kernel(x_ref, w_ref, b_ref, o_ref):
    """Single-invocation fused ensemble forward (combine pre-folded into weights).

    x_ref : VMEM (B_pad, D)  bfloat16  -- flattened, batch-padded input
    w_ref : VMEM (D, NCP)    bfloat16  -- ensemble-combined weights, lane-dense
    b_ref : VMEM (1, NCP)    float32   -- ensemble-combined bias
    o_ref : VMEM (B_pad, NCP) float32  -- ensemble logits (lane-dense)
    """
    o_ref[...] = (
        jnp.dot(x_ref[...], w_ref[...], preferred_element_type=jnp.float32)
        + b_ref[...]
    )


def prepack_ensemble(weights, biases, ps):
    """One-time weight prep (run at model init, NOT per forward call).

    weights: [M, D, NC] f32; biases: [M, NC] f32; ps: [M] f32 (ensemble coefficients).
    Returns (w_packed [D, NCP] bf16, b_packed [1, NCP] f32).
    """
    M, D, NC = weights.shape
    ncp = pl.cdiv(NC, LANE) * LANE          # lane-dense class dim (10 -> 128)

    ps = ps.astype(jnp.float32)
    p_norm = ps / jnp.sum(ps)               # p_m / sum(p), f32

    # Fold the weighted ensemble combine into the weights/bias, in f32.
    w_comb = jnp.einsum("m,mdc->dc", p_norm, weights.astype(jnp.float32))  # [D, NC]
    b_comb = jnp.einsum("m,mc->c", p_norm, biases.astype(jnp.float32))     # [NC]

    # Lane-pad, then cast weights to bf16 LAST (single rounding site); bias stays f32.
    w_packed = jnp.pad(w_comb, ((0, 0), (0, ncp - NC))).astype(jnp.bfloat16)
    b_packed = jnp.pad(b_comb, ((0, ncp - NC),)).reshape(1, ncp).astype(jnp.float32)
    return w_packed, b_packed


@functools.partial(jax.jit, static_argnames=("num_classes",))
def ensemble1_forward(x_nchw, w_packed, b_packed, *, num_classes):
    """x_nchw: [B, C, H, W]; w_packed/b_packed: from prepack_ensemble()."""
    B = x_nchw.shape[0]
    ncp = w_packed.shape[1]
    b_pad = pl.cdiv(B, SUBLANE) * SUBLANE   # sublane-pad the batch (2 -> 8)

    x_flat = x_nchw.reshape(B, -1).astype(jnp.bfloat16)
    x_pad = jnp.pad(x_flat, ((0, b_pad - B), (0, 0)))

    out_pad = pl.pallas_call(
        ensemble_kernel,
        out_shape=jax.ShapeDtypeStruct((b_pad, ncp), jnp.float32),
        in_specs=[
            pl.BlockSpec(memory_space=pltpu.MemorySpace.VMEM),   # x (B_pad, D)
            pl.BlockSpec(memory_space=pltpu.MemorySpace.VMEM),   # W (D, NCP)
            pl.BlockSpec(memory_space=pltpu.MemorySpace.VMEM),   # b (1, NCP)
        ],
        out_specs=pl.BlockSpec(memory_space=pltpu.MemorySpace.VMEM),
    )(x_pad, w_packed, b_packed)

    return out_pad[:B, :num_classes]


def reference_forward(x_nchw, weights, biases, ps):
    """Pure-JAX f32 reference mirroring the PyTorch Ensemble1.forward semantics."""
    B = x_nchw.shape[0]
    x_flat = x_nchw.reshape(B, -1).astype(jnp.float32)
    logits = jnp.einsum("bd,mdc->mbc", x_flat, weights) + biases[:, None, :]
    num = jnp.sum(logits * ps[:, None, None], axis=0)
    return num / jnp.sum(ps)


if __name__ == "__main__":
    key = jax.random.PRNGKey(0)
    kx, kw, kb, kp = jax.random.split(key, 4)

    B, C, H, W = 2, 4, 16, 16          # small NCHW input
    NUM_CLASSES = 10
    D = C * H * W

    x = jax.random.normal(kx, (B, C, H, W), dtype=jnp.float32)
    weights = 0.05 * jax.random.normal(kw, (NUM_MODELS, D, NUM_CLASSES),
                                       dtype=jnp.float32)
    biases = 0.1 * jax.random.normal(kb, (NUM_MODELS, NUM_CLASSES),
                                     dtype=jnp.float32)
    # deterministic positive ensemble coefficients p1..p5
    ps = jax.random.uniform(kp, (NUM_MODELS,), dtype=jnp.float32,
                            minval=0.1, maxval=1.0)

    # One-time weight prep (cached across forward calls).
    w_packed, b_packed = jax.block_until_ready(prepack_ensemble(weights, biases, ps))

    out = jax.block_until_ready(
        ensemble1_forward(x, w_packed, b_packed, num_classes=NUM_CLASSES))
    ref = jax.block_until_ready(reference_forward(x, weights, biases, ps))

    assert out.shape == (B, NUM_CLASSES)
    # bf16 matmul operands (f32 MXU accumulation, f32 combine-fold) vs f32 reference.
    assert jnp.allclose(out, ref, atol=5e-2, rtol=5e-2), "mismatch vs reference"

    print("KERNEL_OK")
</pallas_src>

<mosaic_0001>
module attributes {stable_mosaic.version = 11 : i64} {
  func.func @ensemble_kernel(%arg0: memref<8x1024xbf16, #tpu.memory_space<vmem>>, %arg1: memref<1024x128xbf16, #tpu.memory_space<vmem>>, %arg2: memref<1x128xf32, #tpu.memory_space<vmem>>, %arg3: memref<8x128xf32, #tpu.memory_space<vmem>>) attributes {dimension_semantics = [], scalar_prefetch = 0 : i64, scratch_operands = 0 : i64, tpu.core_type = #tpu.core_type<tc>} {
    %c0 = arith.constant 0 : index
    %c0_0 = arith.constant 0 : index
    %0 = vector.load %arg0[%c0, %c0_0] : memref<8x1024xbf16, #tpu.memory_space<vmem>>, vector<8x1024xbf16>
    %c0_1 = arith.constant 0 : index
    %c0_2 = arith.constant 0 : index
    %1 = vector.load %arg1[%c0_1, %c0_2] : memref<1024x128xbf16, #tpu.memory_space<vmem>>, vector<1024x128xbf16>
    %cst = arith.constant dense<0.000000e+00> : vector<8x128xf32>
    %2 = tpu.matmul %0, %1, %cst {dimension_numbers = #tpu.dot_dimension_numbers<[1], [0], [0], [1], [0, 0, 1, 1], [], []>} : vector<8x1024xbf16>, vector<1024x128xbf16>, vector<8x128xf32> -> vector<8x128xf32>
    %c0_3 = arith.constant 0 : index
    %c0_4 = arith.constant 0 : index
    %3 = vector.load %arg2[%c0_3, %c0_4] : memref<1x128xf32, #tpu.memory_space<vmem>>, vector<1x128xf32>
    %4 = vector.broadcast %3 : vector<1x128xf32> to vector<8x128xf32>
    %5 = arith.addf %2, %4 : vector<8x128xf32>
    %c0_5 = arith.constant 0 : index
    %c0_6 = arith.constant 0 : index
    %6 = vector.load %arg3[%c0_5, %c0_6] : memref<8x128xf32, #tpu.memory_space<vmem>>, vector<8x128xf32>
    tpu.vector_store %arg3[%c0_5, %c0_6], %5 {strides = array<i32>} : memref<8x128xf32, #tpu.memory_space<vmem>>, vector<8x128xf32>,
    return
  }
}

</mosaic_0001>

<llo_original>
// kernel: ensemble1_forward.1
$region0: #{ensemble1_forward.1}
  #allocation0 [shape = 'u32[]', space=smem, size = 0x4, offset = 0x4, fixed_abs, tag = 'smem constant byte address 0x4 - core index']
  #allocation1 [shape = 'u32[72,128]{1,0:T(1,128)}', space=vmem, size = 0x9000, scoped, tag = 'internal scratch']
  %s0 = inlined_call_operand.vmem [shape: bf16[8,1024], index: 0, kind: input, shape index: {}]
  %s1 = inlined_call_operand.hbm [shape: bf16[1024,128], index: 1, kind: input, shape index: {}]
  %s2 = inlined_call_operand.vmem [shape: f32[1,128], index: 2, kind: input, shape index: {}]
  %s3 = inlined_call_operand.vmem [shape: f32[8,128], index: 3, kind: output, shape index: {}]
  %s4 = sld [smem:[#allocation0]]
  $region26: #{ensemble1_forward.1} parent=0
    _
  %s6 = ssub.s32 1, %s4
  %s7 = scalar_select 0, %s6, %s4
  $region1: #{ensemble1_forward.1} parent=0
    #allocation2 [shape = 'u8[262144]{0}', space=vmem, size = 0x40000, scoped, tag = 'input window, operand 1, single buffered']
    #allocation3 [shape = 's32[1]{0}', space=sflag, size = 0x4, scoped, tag = 'scoped memory for ensemble1_forward.1']
    %8 = vsyncpa [#allocation3], 0
    // Predicated region
    $region2: #{ensemble1_forward.1} parent=1 // pred_check
      _
    $region3: #{ensemble1_forward.1} parent=1 // pred_check_branch
      %10 = sbr.rel (0) target = $region5
    $region4: #{ensemble1_forward.1} parent=1 // pred_region
      _
    $region5: #{ensemble1_forward.1} parent=1 // pred_fallthru
      _
    // Predicated region
    $region6: #{ensemble1_forward.1} parent=1 // pred_check
      _
    $region7: #{ensemble1_forward.1} parent=1 // pred_check_branch
      %12 = sbr.rel (0) target = $region9
    $region8: #{ensemble1_forward.1} parent=1 // pred_region
      %14 = vsyncadd [#allocation3], 0
      %s15 = sshll.u32 %s1, 4
      %s16 = int_to_ptr.hbm [resolvable:$true] %s15
      %s17 = sshll.u32 [#allocation2], 4
      %s18 = int_to_ptr.vmem [resolvable:$true] %s17
      %23 = dma.hbm_to_vmem [thread:$0]  %s16, 8192, %s18, [#allocation3], 64, 64, 4
    $region9: #{ensemble1_forward.1} parent=1 // pred_fallthru
      _
    // Predicated region
    $region10: #{ensemble1_forward.1} parent=1 // pred_check
      _
    $region11: #{ensemble1_forward.1} parent=1 // pred_check_branch
      %25 = sbr.rel (0) target = $region13
    $region12: #{ensemble1_forward.1} parent=1 // pred_region
      _
    $region13: #{ensemble1_forward.1} parent=1 // pred_fallthru
      _
    // Predicated region
    $region14: #{ensemble1_forward.1} parent=1 // pred_check
      _
    $region15: #{ensemble1_forward.1} parent=1 // pred_check_branch
      %27 = sbr.rel (0) target = $region17
    $region16: #{ensemble1_forward.1} parent=1 // pred_region
      %29 = dma.done [#allocation3], 8192
    $region17: #{ensemble1_forward.1} parent=1 // pred_fallthru
      _
    %v30 = vld [vmem:[%s0] sm:$0xff]
    %v31 = vld [vmem:[%s0 + $0x8] sm:$0xff]
    %v32 = vld [vmem:[%s0 + $0x10] sm:$0xff]
    %v33 = vld [vmem:[%s0 + $0x18] sm:$0xff]
    %v34 = vld [vmem:[#allocation2] sm:$0xf]
    %v35 = vld [vmem:[#allocation2 + $0x4] sm:$0xf]
    %v36 = vld [vmem:[#allocation2 + $0x8] sm:$0xf]
    %v37 = vld [vmem:[#allocation2 + $0xc] sm:$0xf]
    %v38 = vld [vmem:[#allocation2 + $0x10] sm:$0xf]
    %v39 = vld [vmem:[#allocation2 + $0x14] sm:$0xf]
    %v40 = vld [vmem:[#allocation2 + $0x18] sm:$0xf]
    %v41 = vld [vmem:[#allocation2 + $0x1c] sm:$0xf]
    %v42 = vld [vmem:[#allocation2 + $0x20] sm:$0xf]
    %v43 = vld [vmem:[#allocation2 + $0x24] sm:$0xf]
    %v44 = vld [vmem:[#allocation2 + $0x28] sm:$0xf]
    %v45 = vld [vmem:[#allocation2 + $0x2c] sm:$0xf]
    %v46 = vld [vmem:[#allocation2 + $0x30] sm:$0xf]
    %v47 = vld [vmem:[#allocation2 + $0x34] sm:$0xf]
    %v48 = vld [vmem:[#allocation2 + $0x38] sm:$0xf]
    %v49 = vld [vmem:[#allocation2 + $0x3c] sm:$0xf]
    %v50 = vld [vmem:[#allocation2 + $0x40] sm:$0xf]
    %v51 = vld [vmem:[#allocation2 + $0x44] sm:$0xf]
    %v52 = vld [vmem:[#allocation2 + $0x48] sm:$0xf]
    %v53 = vld [vmem:[#allocation2 + $0x4c] sm:$0xf]
    %v54 = vld [vmem:[#allocation2 + $0x50] sm:$0xf]
    %v55 = vld [vmem:[#allocation2 + $0x54] sm:$0xf]
    %v56 = vld [vmem:[#allocation2 + $0x58] sm:$0xf]
    %v57 = vld [vmem:[#allocation2 + $0x5c] sm:$0xf]
    %v58 = vld [vmem:[#allocation2 + $0x60] sm:$0xf]
    %v59 = vld [vmem:[#allocation2 + $0x64] sm:$0xf]
    %v60 = vld [vmem:[#allocation2 + $0x68] sm:$0xf]
    %v61 = vld [vmem:[#allocation2 + $0x6c] sm:$0xf]
    %v62 = vld [vmem:[#allocation2 + $0x70] sm:$0xf]
    %v63 = vld [vmem:[#allocation2 + $0x74] sm:$0xf]
    %v64 = vld [vmem:[#allocation2 + $0x78] sm:$0xf]
    %v65 = vld [vmem:[#allocation2 + $0x7c] sm:$0xf]
    %v66 = vld [vmem:[#allocation2 + $0x80] sm:$0xf]
    %v67 = vld [vmem:[#allocation2 + $0x84] sm:$0xf]
    %v68 = vld [vmem:[#allocation2 + $0x88] sm:$0xf]
    %v69 = vld [vmem:[#allocation2 + $0x8c] sm:$0xf]
    %v70 = vld [vmem:[#allocation2 + $0x90] sm:$0xf]
    %v71 = vld [vmem:[#allocation2 + $0x94] sm:$0xf]
    %v72 = vld [vmem:[#allocation2 + $0x98] sm:$0xf]
    %v73 = vld [vmem:[#allocation2 + $0x9c] sm:$0xf]
    %v74 = vld [vmem:[#allocation2 + $0xa0] sm:$0xf]
    %v75 = vld [vmem:[#allocation2 + $0xa4] sm:$0xf]
    %v76 = vld [vmem:[#allocation2 + $0xa8] sm:$0xf]
    %v77 = vld [vmem:[#allocation2 + $0xac] sm:$0xf]
    %v78 = vld [vmem:[#allocation2 + $0xb0] sm:$0xf]
    %v79 = vld [vmem:[#allocation2 + $0xb4] sm:$0xf]
    %v80 = vld [vmem:[#allocation2 + $0xb8] sm:$0xf]
    %v81 = vld [vmem:[#allocation2 + $0xbc] sm:$0xf]
    %v82 = vld [vmem:[#allocation2 + $0xc0] sm:$0xf]
    %v83 = vld [vmem:[#allocation2 + $0xc4] sm:$0xf]
    %v84 = vld [vmem:[#allocation2 + $0xc8] sm:$0xf]
    %v85 = vld [vmem:[#allocation2 + $0xcc] sm:$0xf]
    %v86 = vld [vmem:[#allocation2 + $0xd0] sm:$0xf]
    %v87 = vld [vmem:[#allocation2 + $0xd4] sm:$0xf]
    %v88 = vld [vmem:[#allocation2 + $0xd8] sm:$0xf]
    %v89 = vld [vmem:[#allocation2 + $0xdc] sm:$0xf]
    %v90 = vld [vmem:[#allocation2 + $0xe0] sm:$0xf]
    %v91 = vld [vmem:[#allocation2 + $0xe4] sm:$0xf]
    %v92 = vld [vmem:[#allocation2 + $0xe8] sm:$0xf]
    %v93 = vld [vmem:[#allocation2 + $0xec] sm:$0xf]
    %v94 = vld [vmem:[#allocation2 + $0xf0] sm:$0xf]
    %v95 = vld [vmem:[#allocation2 + $0xf4] sm:$0xf]
    %v96 = vld [vmem:[#allocation2 + $0xf8] sm:$0xf]
    %v97 = vld [vmem:[#allocation2 + $0xfc] sm:$0xf]
    %v98 = vld [vmem:[#allocation2 + $0x100] sm:$0xf]
    %v99 = vld [vmem:[#allocation2 + $0x104] sm:$0xf]
    %v100 = vld [vmem:[#allocation2 + $0x108] sm:$0xf]
    %v101 = vld [vmem:[#allocation2 + $0x10c] sm:$0xf]
    %v102 = vld [vmem:[#allocation2 + $0x110] sm:$0xf]
    %v103 = vld [vmem:[#allocation2 + $0x114] sm:$0xf]
    %v104 = vld [vmem:[#allocation2 + $0x118] sm:$0xf]
    %v105 = vld [vmem:[#allocation2 + $0x11c] sm:$0xf]
    %v106 = vld [vmem:[#allocation2 + $0x120] sm:$0xf]
    %v107 = vld [vmem:[#allocation2 + $0x124] sm:$0xf]
    %v108 = vld [vmem:[#allocation2 + $0x128] sm:$0xf]
    %v109 = vld [vmem:[#allocation2 + $0x12c] sm:$0xf]
    %v110 = vld [vmem:[#allocation2 + $0x130] sm:$0xf]
    %v111 = vld [vmem:[#allocation2 + $0x134] sm:$0xf]
    %v112 = vld [vmem:[#allocation2 + $0x138] sm:$0xf]
    %v113 = vld [vmem:[#allocation2 + $0x13c] sm:$0xf]
    %v114 = vld [vmem:[#allocation2 + $0x140] sm:$0xf]
    %v115 = vld [vmem:[#allocation2 + $0x144] sm:$0xf]
    %v116 = vld [vmem:[#allocation2 + $0x148] sm:$0xf]
    %v117 = vld [vmem:[#allocation2 + $0x14c] sm:$0xf]
    %v118 = vld [vmem:[#allocation2 + $0x150] sm:$0xf]
    %v119 = vld [vmem:[#allocation2 + $0x154] sm:$0xf]
    %v120 = vld [vmem:[#allocation2 + $0x158] sm:$0xf]
    %v121 = vld [vmem:[#allocation2 + $0x15c] sm:$0xf]
    %v122 = vld [vmem:[#allocation2 + $0x160] sm:$0xf]
    %v123 = vld [vmem:[#allocation2 + $0x164] sm:$0xf]
    %v124 = vld [vmem:[#allocation2 + $0x168] sm:$0xf]
    %v125 = vld [vmem:[#allocation2 + $0x16c] sm:$0xf]
    %v126 = vld [vmem:[#allocation2 + $0x170] sm:$0xf]
    %v127 = vld [vmem:[#allocation2 + $0x174] sm:$0xf]
    %v128 = vld [vmem:[#allocation2 + $0x178] sm:$0xf]
    %v129 = vld [vmem:[#allocation2 + $0x17c] sm:$0xf]
    %v130 = vld [vmem:[#allocation2 + $0x180] sm:$0xf]
    %v131 = vld [vmem:[#allocation2 + $0x184] sm:$0xf]
    %v132 = vld [vmem:[#allocation2 + $0x188] sm:$0xf]
    %v133 = vld [vmem:[#allocation2 + $0x18c] sm:$0xf]
    %v134 = vld [vmem:[#allocation2 + $0x190] sm:$0xf]
    %v135 = vld [vmem:[#allocation2 + $0x194] sm:$0xf]
    %v136 = vld [vmem:[#allocation2 + $0x198] sm:$0xf]
    %v137 = vld [vmem:[#allocation2 + $0x19c] sm:$0xf]
    %v138 = vld [vmem:[#allocation2 + $0x1a0] sm:$0xf]
    %v139 = vld [vmem:[#allocation2 + $0x1a4] sm:$0xf]
    %v140 = vld [vmem:[#allocation2 + $0x1a8] sm:$0xf]
    %v141 = vld [vmem:[#allocation2 + $0x1ac] sm:$0xf]
    %v142 = vld [vmem:[#allocation2 + $0x1b0] sm:$0xf]
    %v143 = vld [vmem:[#allocation2 + $0x1b4] sm:$0xf]
    %v144 = vld [vmem:[#allocation2 + $0x1b8] sm:$0xf]
    %v145 = vld [vmem:[#allocation2 + $0x1bc] sm:$0xf]
    %v146 = vld [vmem:[#allocation2 + $0x1c0] sm:$0xf]
    %v147 = vld [vmem:[#allocation2 + $0x1c4] sm:$0xf]
    %v148 = vld [vmem:[#allocation2 + $0x1c8] sm:$0xf]
    %v149 = vld [vmem:[#allocation2 + $0x1cc] sm:$0xf]
    %v150 = vld [vmem:[#allocation2 + $0x1d0] sm:$0xf]
    %v151 = vld [vmem:[#allocation2 + $0x1d4] sm:$0xf]
    %v152 = vld [vmem:[#allocation2 + $0x1d8] sm:$0xf]
    %v153 = vld [vmem:[#allocation2 + $0x1dc] sm:$0xf]
    %v154 = vld [vmem:[#allocation2 + $0x1e0] sm:$0xf]
    %v155 = vld [vmem:[#allocation2 + $0x1e4] sm:$0xf]
    %v156 = vld [vmem:[#allocation2 + $0x1e8] sm:$0xf]
    %v157 = vld [vmem:[#allocation2 + $0x1ec] sm:$0xf]
    %v158 = vld [vmem:[#allocation2 + $0x1f0] sm:$0xf]
    %v159 = vld [vmem:[#allocation2 + $0x1f4] sm:$0xf]
    %v160 = vld [vmem:[#allocation2 + $0x1f8] sm:$0xf]
    %v161 = vld [vmem:[#allocation2 + $0x1fc] sm:$0xf]
    %v162 = vld [vmem:[%s2] sm:$0x1]
    %v164 = vperm.slane %v162, 0
    %v170 = vunpack.c.l.b16 %v30
    %v171 = vunpack.c.h.b16 %v30
    %v172 = vunpack.c.l.b16 %v31
    %v173 = vunpack.c.h.b16 %v31
    %v174 = vunpack.c.l.b16 %v32
    %v175 = vunpack.c.h.b16 %v32
    %v176 = vunpack.c.l.b16 %v33
    %v177 = vunpack.c.h.b16 %v33
    %v178 = vpack.c.b16 %v170, %v170
    %v179 = vpack.c.b16 %v171, %v171
    %v180 = vpack.c.b16 %v172, %v172
    %v181 = vpack.c.b16 %v173, %v173
    %v182 = vpack.c.b16 %v174, %v174
    %v183 = vpack.c.b16 %v175, %v175
    %v184 = vpack.c.b16 %v176, %v176
    %v185 = vpack.c.b16 %v177, %v177
    %v322 = vunpack.c.l.b16 %v34
    %v323 = vunpack.c.l.b16 %v35
    %v324 = vunpack.c.l.b16 %v36
    %v325 = vunpack.c.l.b16 %v37
    %v326 = vunpack.c.l.b16 %v38
    %v327 = vunpack.c.l.b16 %v39
    %v328 = vunpack.c.l.b16 %v40
    %v329 = vunpack.c.l.b16 %v41
    %v330 = vunpack.c.l.b16 %v42
    %v331 = vunpack.c.l.b16 %v43
    %v332 = vunpack.c.l.b16 %v44
    %v333 = vunpack.c.l.b16 %v45
    %v334 = vunpack.c.l.b16 %v46
    %v335 = vunpack.c.l.b16 %v47
    %v336 = vunpack.c.l.b16 %v48
    %v337 = vunpack.c.l.b16 %v49
    %v338 = vunpack.c.l.b16 %v50
    %v339 = vunpack.c.l.b16 %v51
    %v340 = vunpack.c.l.b16 %v52
    %v341 = vunpack.c.l.b16 %v53
    %v342 = vunpack.c.l.b16 %v54
    %v343 = vunpack.c.l.b16 %v55
    %v344 = vunpack.c.l.b16 %v56
    %v345 = vunpack.c.l.b16 %v57
    %v346 = vunpack.c.l.b16 %v58
    %v347 = vunpack.c.l.b16 %v59
    %v348 = vunpack.c.l.b16 %v60
    %v349 = vunpack.c.l.b16 %v61
    %v350 = vunpack.c.l.b16 %v62
    %v351 = vunpack.c.l.b16 %v63
    %v352 = vunpack.c.l.b16 %v64
    %v353 = vunpack.c.l.b16 %v65
    %v354 = vunpack.c.l.b16 %v66
    %v355 = vunpack.c.l.b16 %v67
    %v356 = vunpack.c.l.b16 %v68
    %v357 = vunpack.c.l.b16 %v69
    %v358 = vunpack.c.l.b16 %v70
    %v359 = vunpack.c.l.b16 %v71
    %v360 = vunpack.c.l.b16 %v72
    %v361 = vunpack.c.l.b16 %v73
    %v362 = vunpack.c.l.b16 %v74
    %v363 = vunpack.c.l.b16 %v75
    %v364 = vunpack.c.l.b16 %v76
    %v365 = vunpack.c.l.b16 %v77
    %v366 = vunpack.c.l.b16 %v78
    %v367 = vunpack.c.l.b16 %v79
    %v368 = vunpack.c.l.b16 %v80
    %v369 = vunpack.c.l.b16 %v81
    %v370 = vunpack.c.l.b16 %v82
    %v371 = vunpack.c.l.b16 %v83
    %v372 = vunpack.c.l.b16 %v84
    %v373 = vunpack.c.l.b16 %v85
    %v374 = vunpack.c.l.b16 %v86
    %v375 = vunpack.c.l.b16 %v87
    %v376 = vunpack.c.l.b16 %v88
    %v377 = vunpack.c.l.b16 %v89
    %v378 = vunpack.c.l.b16 %v90
    %v379 = vunpack.c.l.b16 %v91
    %v380 = vunpack.c.l.b16 %v92
    %v381 = vunpack.c.l.b16 %v93
    %v382 = vunpack.c.l.b16 %v94
    %v383 = vunpack.c.l.b16 %v95
    %v384 = vunpack.c.l.b16 %v96
    %v385 = vunpack.c.l.b16 %v97
    %v386 = vunpack.c.l.b16 %v98
    %v387 = vunpack.c.l.b16 %v99
    %v388 = vunpack.c.l.b16 %v100
    %v389 = vunpack.c.l.b16 %v101
    %v390 = vunpack.c.l.b16 %v102
    %v391 = vunpack.c.l.b16 %v103
    %v392 = vunpack.c.l.b16 %v104
    %v393 = vunpack.c.l.b16 %v105
    %v394 = vunpack.c.l.b16 %v106
    %v395 = vunpack.c.l.b16 %v107
    %v396 = vunpack.c.l.b16 %v108
    %v397 = vunpack.c.l.b16 %v109
    %v398 = vunpack.c.l.b16 %v110
    %v399 = vunpack.c.l.b16 %v111
    %v400 = vunpack.c.l.b16 %v112
    %v401 = vunpack.c.l.b16 %v113
    %v402 = vunpack.c.l.b16 %v114
    %v403 = vunpack.c.l.b16 %v115
    %v404 = vunpack.c.l.b16 %v116
    %v405 = vunpack.c.l.b16 %v117
    %v406 = vunpack.c.l.b16 %v118
    %v407 = vunpack.c.l.b16 %v119
    %v408 = vunpack.c.l.b16 %v120
    %v409 = vunpack.c.l.b16 %v121
    %v410 = vunpack.c.l.b16 %v122
    %v411 = vunpack.c.l.b16 %v123
    %v412 = vunpack.c.l.b16 %v124
    %v413 = vunpack.c.l.b16 %v125
    %v414 = vunpack.c.l.b16 %v126
    %v415 = vunpack.c.l.b16 %v127
    %v416 = vunpack.c.l.b16 %v128
    %v417 = vunpack.c.l.b16 %v129
    %v418 = vunpack.c.l.b16 %v130
    %v419 = vunpack.c.l.b16 %v131
    %v420 = vunpack.c.l.b16 %v132
    %v421 = vunpack.c.l.b16 %v133
    %v422 = vunpack.c.l.b16 %v134
    %v423 = vunpack.c.l.b16 %v135
    %v424 = vunpack.c.l.b16 %v136
    %v425 = vunpack.c.l.b16 %v137
    %v426 = vunpack.c.l.b16 %v138
    %v427 = vunpack.c.l.b16 %v139
    %v428 = vunpack.c.l.b16 %v140
    %v429 = vunpack.c.l.b16 %v141
    %v430 = vunpack.c.l.b16 %v142
    %v431 = vunpack.c.l.b16 %v143
    %v432 = vunpack.c.l.b16 %v144
    %v433 = vunpack.c.l.b16 %v145
    %v434 = vunpack.c.l.b16 %v146
    %v435 = vunpack.c.l.b16 %v147
    %v436 = vunpack.c.l.b16 %v148
    %v437 = vunpack.c.l.b16 %v149
    %v438 = vunpack.c.l.b16 %v150
    %v439 = vunpack.c.l.b16 %v151
    %v440 = vunpack.c.l.b16 %v152
    %v441 = vunpack.c.l.b16 %v153
    %v442 = vunpack.c.l.b16 %v154
    %v443 = vunpack.c.l.b16 %v155
    %v444 = vunpack.c.l.b16 %v156
    %v445 = vunpack.c.l.b16 %v157
    %v446 = vunpack.c.l.b16 %v158
    %v447 = vunpack.c.l.b16 %v159
    %v448 = vunpack.c.l.b16 %v160
    %v449 = vunpack.c.l.b16 %v161
    %v450 = vpack.c.b16 %v323, %v322
    %v451 = vpack.c.b16 %v325, %v324
    %v452 = vpack.c.b16 %v327, %v326
    %v453 = vpack.c.b16 %v329, %v328
    %v454 = vpack.c.b16 %v331, %v330
    %v455 = vpack.c.b16 %v333, %v332
    %v456 = vpack.c.b16 %v335, %v334
    %v457 = vpack.c.b16 %v337, %v336
    %v458 = vpack.c.b16 %v339, %v338
    %v459 = vpack.c.b16 %v341, %v340
    %v460 = vpack.c.b16 %v343, %v342
    %v461 = vpack.c.b16 %v345, %v344
    %v462 = vpack.c.b16 %v347, %v346
    %v463 = vpack.c.b16 %v349, %v348
    %v464 = vpack.c.b16 %v351, %v350
    %v465 = vpack.c.b16 %v353, %v352
    %v466 = vpack.c.b16 %v355, %v354
    %v467 = vpack.c.b16 %v357, %v356
    %v468 = vpack.c.b16 %v359, %v358
    %v469 = vpack.c.b16 %v361, %v360
    %v470 = vpack.c.b16 %v363, %v362
    %v471 = vpack.c.b16 %v365, %v364
    %v472 = vpack.c.b16 %v367, %v366
    %v473 = vpack.c.b16 %v369, %v368
    %v474 = vpack.c.b16 %v371, %v370
    %v475 = vpack.c.b16 %v373, %v372
    %v476 = vpack.c.b16 %v375, %v374
    %v477 = vpack.c.b16 %v377, %v376
    %v478 = vpack.c.b16 %v379, %v378
    %v479 = vpack.c.b16 %v381, %v380
    %v480 = vpack.c.b16 %v383, %v382
    %v481 = vpack.c.b16 %v385, %v384
    %v482 = vpack.c.b16 %v387, %v386
    %v483 = vpack.c.b16 %v389, %v388
    %v484 = vpack.c.b16 %v391, %v390
    %v485 = vpack.c.b16 %v393, %v392
    %v486 = vpack.c.b16 %v395, %v394
    %v487 = vpack.c.b16 %v397, %v396
    %v488 = vpack.c.b16 %v399, %v398
    %v489 = vpack.c.b16 %v401, %v400
    %v490 = vpack.c.b16 %v403, %v402
    %v491 = vpack.c.b16 %v405, %v404
    %v492 = vpack.c.b16 %v407, %v406
    %v493 = vpack.c.b16 %v409, %v408
    %v494 = vpack.c.b16 %v411, %v410
    %v495 = vpack.c.b16 %v413, %v412
    %v496 = vpack.c.b16 %v415, %v414
    %v497 = vpack.c.b16 %v417, %v416
    %v498 = vpack.c.b16 %v419, %v418
    %v499 = vpack.c.b16 %v421, %v420
    %v500 = vpack.c.b16 %v423, %v422
    %v501 = vpack.c.b16 %v425, %v424
    %v502 = vpack.c.b16 %v427, %v426
    %v503 = vpack.c.b16 %v429, %v428
    %v504 = vpack.c.b16 %v431, %v430
    %v505 = vpack.c.b16 %v433, %v432
    %v506 = vpack.c.b16 %v435, %v434
    %v507 = vpack.c.b16 %v437, %v436
    %v508 = vpack.c.b16 %v439, %v438
    %v509 = vpack.c.b16 %v441, %v440
    %v510 = vpack.c.b16 %v443, %v442
    %v511 = vpack.c.b16 %v445, %v444
    %v512 = vpack.c.b16 %v447, %v446
    %v513 = vpack.c.b16 %v449, %v448
    %578 = vmatpush.bf16.msra.mxu0 %v457
    %579 = vmatpush.bf16.msra.mxu0 %v456
    %580 = vmatpush.bf16.msra.mxu0 %v455
    %581 = vmatpush.bf16.msra.mxu0 %v454
    %582 = vmatpush.bf16.msra.mxu0 %v453
    %583 = vmatpush.bf16.msra.mxu0 %v452
    %584 = vmatpush.bf16.msra.mxu0 %v451
    %585 = vmatpush.bf16.msra.mxu0 %v450
    %586 = vmatmul.bf16.gmra.mxu0 %v178
    %v587 = vpop.f32.mrf.mxu0
    %v588 = vadd.f32 %v164, %v587
    %v589 = vpop.f32.mrf.mxu0
    %590 = vdwg.mxu0
    %591 = vmatpush.bf16.msra.mxu0 %v465
    %592 = vmatpush.bf16.msra.mxu0 %v464
    %593 = vmatpush.bf16.msra.mxu0 %v463
    %594 = vmatpush.bf16.msra.mxu0 %v462
    %595 = vmatpush.bf16.msra.mxu0 %v461
    %596 = vmatpush.bf16.msra.mxu0 %v460
    %597 = vmatpush.bf16.msra.mxu0 %v459
    %598 = vmatpush.bf16.msra.mxu0 %v458
    %599 = vmatmul.bf16.gmra.mxu0 %v179
    %v600 = vpop.f32.mrf.mxu0
    %v601 = vadd.f32 %v588, %v600
    %v602 = vpop.f32.mrf.mxu0
    %603 = vdwg.mxu0
    %604 = vmatpush.bf16.msra.mxu0 %v473
    %605 = vmatpush.bf16.msra.mxu0 %v472
    %606 = vmatpush.bf16.msra.mxu0 %v471
    %607 = vmatpush.bf16.msra.mxu0 %v470
    %608 = vmatpush.bf16.msra.mxu0 %v469
    %609 = vmatpush.bf16.msra.mxu0 %v468
    %610 = vmatpush.bf16.msra.mxu0 %v467
    %611 = vmatpush.bf16.msra.mxu0 %v466
    %612 = vmatmul.bf16.gmra.mxu0 %v180
    %v613 = vpop.f32.mrf.mxu0
    %v614 = vadd.f32 %v601, %v613
    %v615 = vpop.f32.mrf.mxu0
    %616 = vdwg.mxu0
    %617 = vmatpush.bf16.msra.mxu0 %v481
    %618 = vmatpush.bf16.msra.mxu0 %v480
    %619 = vmatpush.bf16.msra.mxu0 %v479
    %620 = vmatpush.bf16.msra.mxu0 %v478
    %621 = vmatpush.bf16.msra.mxu0 %v477
    %622 = vmatpush.bf16.msra.mxu0 %v476
    %623 = vmatpush.bf16.msra.mxu0 %v475
    %624 = vmatpush.bf16.msra.mxu0 %v474
    %625 = vmatmul.bf16.gmra.mxu0 %v181
    %v626 = vpop.f32.mrf.mxu0
    %v627 = vadd.f32 %v614, %v626
    %v628 = vpop.f32.mrf.mxu0
    %629 = vdwg.mxu0
    %630 = vmatpush.bf16.msra.mxu0 %v489
    %631 = vmatpush.bf16.msra.mxu0 %v488
    %632 = vmatpush.bf16.msra.mxu0 %v487
    %633 = vmatpush.bf16.msra.mxu0 %v486
    %634 = vmatpush.bf16.msra.mxu0 %v485
    %635 = vmatpush.bf16.msra.mxu0 %v484
    %636 = vmatpush.bf16.msra.mxu0 %v483
    %637 = vmatpush.bf16.msra.mxu0 %v482
    %638 = vmatmul.bf16.gmra.mxu0 %v182
    %v639 = vpop.f32.mrf.mxu0
    %v640 = vadd.f32 %v627, %v639
    %v641 = vpop.f32.mrf.mxu0
    %642 = vdwg.mxu0
    %643 = vmatpush.bf16.msra.mxu0 %v497
    %644 = vmatpush.bf16.msra.mxu0 %v496
    %645 = vmatpush.bf16.msra.mxu0 %v495
    %646 = vmatpush.bf16.msra.mxu0 %v494
    %647 = vmatpush.bf16.msra.mxu0 %v493
    %648 = vmatpush.bf16.msra.mxu0 %v492
    %649 = vmatpush.bf16.msra.mxu0 %v491
    %650 = vmatpush.bf16.msra.mxu0 %v490
    %651 = vmatmul.bf16.gmra.mxu0 %v183
    %v652 = vpop.f32.mrf.mxu0
    %v653 = vadd.f32 %v640, %v652
    %v654 = vpop.f32.mrf.mxu0
    %655 = vdwg.mxu0
    %656 = vmatpush.bf16.msra.mxu0 %v505
    %657 = vmatpush.bf16.msra.mxu0 %v504
    %658 = vmatpush.bf16.msra.mxu0 %v503
    %659 = vmatpush.bf16.msra.mxu0 %v502
    %660 = vmatpush.bf16.msra.mxu0 %v501
    %661 = vmatpush.bf16.msra.mxu0 %v500
    %662 = vmatpush.bf16.msra.mxu0 %v499
    %663 = vmatpush.bf16.msra.mxu0 %v498
    %664 = vmatmul.bf16.gmra.mxu0 %v184
    %v665 = vpop.f32.mrf.mxu0
    %v666 = vadd.f32 %v653, %v665
    %v667 = vpop.f32.mrf.mxu0
    %668 = vdwg.mxu0
    %669 = vmatpush.bf16.msra.mxu0 %v513
    %670 = vmatpush.bf16.msra.mxu0 %v512
    %671 = vmatpush.bf16.msra.mxu0 %v511
    %672 = vmatpush.bf16.msra.mxu0 %v510
    %673 = vmatpush.bf16.msra.mxu0 %v509
    %674 = vmatpush.bf16.msra.mxu0 %v508
    %675 = vmatpush.bf16.msra.mxu0 %v507
    %676 = vmatpush.bf16.msra.mxu0 %v506
    %677 = vmatmul.bf16.gmra.mxu0 %v185
    %v678 = vpop.f32.mrf.mxu0
    %v679 = vadd.f32 %v666, %v678
    %v680 = vpop.f32.mrf.mxu0
    %681 = vdwg.mxu0
    %682 = vst [vmem:[%s3] sm:$0xff] %v679
    // Predicated region
    $region18: #{ensemble1_forward.1} parent=1 // pred_check
      _
    $region19: #{ensemble1_forward.1} parent=1 // pred_check_branch
      %684 = sbr.rel (0) target = $region21
    $region20: #{ensemble1_forward.1} parent=1 // pred_region
      _
    $region21: #{ensemble1_forward.1} parent=1 // pred_fallthru
      _
    // Predicated region
    $region22: #{ensemble1_forward.1} parent=1 // pred_check
      _
    $region23: #{ensemble1_forward.1} parent=1 // pred_check_branch
      %686 = sbr.rel (0) target = $region25
    $region24: #{ensemble1_forward.1} parent=1 // pred_region
      _
    $region25: #{ensemble1_forward.1} parent=1 // pred_fallthru
      _
    %687 = vsyncpa [#allocation3], 1

</llo_original>
